<compile_context>
chip_gen: v7x
topology: tpu7x:2x2x1
jax: 0.10.0
libtpu: 0.0.40
codegen_flags: <defaults>
</compile_context>

<pallas_src>
import functools

import jax
import jax.numpy as jnp
from jax.experimental import pallas as pl
from jax.experimental.pallas import tpu as pltpu

_LANE = 128
_SUBLANE = 8
_UNROLL_MAX = 64          # fully unroll the delay-select chain for H <= this


def _round_up(x, m):
    return -(-x // m) * m


def axon_kernel(ap_ref, hist_ref, delay_ref, sign_ref, newhist_ref, rel_ref):
    # ap_ref      : (Bb, Np, 1)  f32   new action potential for this batch chunk
    # hist_ref    : (Bb, Np, H)  f32   previous AP history (newest at index 0)
    # delay_ref   : (Np, Tp)     int32 per-(axon, terminal) delay in time steps
    # sign_ref    : (Np, 1)      f32   2*is_excitatory - 1 (per axon)
    # newhist_ref : (Bb, Np, H)  f32   updated history (HBM-aliased to hist_ref)
    # rel_ref     : (Bb, Np, Tp)       released neurotransmitter (Axon.release());
    #                                  neurotransmitter == rel * sign (sign^2 == 1)
    H = hist_ref.shape[-1]
    ap = ap_ref[...]                                  # (Bb, Np, 1)
    d = delay_ref[...][None]                          # (1, Np, Tp), mask reused over batch

    # Time gather history[delay[n,t]] as a chain of H selects (H = max_delay + 1).
    acc = jnp.where(d == 0, ap, jnp.zeros((), jnp.float32))
    if H <= _UNROLL_MAX:
        old = hist_ref[...]                           # (Bb, Np, H), static lane slices below
        for h in range(1, H):
            acc = jnp.where(d == h, old[:, :, h - 1:h], acc)
    else:
        # Bounded loop keeps code size / vreg pressure flat.  Reads the *input*
        # history so the gather has no dependency on the newhist stores below.
        def body(h, a):
            return jnp.where(d == h, hist_ref[:, :, pl.ds(h - 1, 1)], a)
        acc = jax.lax.fori_loop(1, H, body, acc, unroll=8)
        # TODO(synk): for very large H a circular-buffer history (scalar-prefetched
        # head index, single (Bb,Np,1) column write) would avoid the full-H rewrite.

    # TODO(synk): default ResponseFunction is identity; stateful response functions
    # (e.g. synaptic traces) would add their elementwise update on `acc` here.
    rel_ref[...] = (acc * sign_ref[...][None]).astype(rel_ref.dtype)

    # History shift (prepend AP, drop oldest) AFTER the gather: no RAW dependency
    # on the select chain, so these stores overlap with the compute above.
    newhist_ref[:, :, :1] = ap
    if H > 1:
        newhist_ref[:, :, 1:] = hist_ref[:, :, : H - 1]


def _tpu_generation():
    try:
        kind = jax.devices()[0].device_kind.lower()
    except Exception:
        return 0
    for gen in (7, 6, 5, 4):
        if f"v{gen}" in kind:
            return gen
    return 0


def _tuning():
    """(vmem_limit_bytes, per-block HBM-traffic target, has_two_tensorcores)."""
    gen = _tpu_generation()
    if gen == 7:            # 64 MiB VMEM, 2 TensorCores per chip
        return 48 << 20, 7 << 20, True
    if gen in (4, 5, 6):    # 128 MiB VMEM, 1 TensorCore
        return 64 << 20, 14 << 20, False
    return 32 << 20, 4 << 20, False     # unknown generation: conservative, proven-safe


def _choose_batch_block(B, Np, Tp, H, vmem_limit, block_target, two_cores):
    """Batch rows per grid step: as large as VMEM / traffic budgets allow."""
    Hp = _round_up(H, _LANE)                          # minor dims lane-pad to 128 in VMEM
    per_row_vmem = 4 * Np * (_LANE + 2 * Hp + Tp)     # ap + hist + newhist + rel
    fixed_vmem = 2 * 4 * Np * (Tp + _LANE)            # delay + sign (double-buffered)
    # TODO(synk): tile the terminal axis too if Np*Tp alone overflows VMEM.
    avail = int(vmem_limit * 0.7) - fixed_vmem        # headroom for compiler scratch
    vmem_cap = max(1, avail // (2 * per_row_vmem))    # x2: double-buffered pipeline
    per_row_hbm = 4 * Np * (1 + 2 * H + Tp)
    traffic_cap = max(1, block_target // per_row_hbm)
    b_blk = min(B, vmem_cap, traffic_cap)
    if two_cores and B >= 2:                          # keep >=2 grid steps for both TCs
        b_blk = min(b_blk, -(-B // 2))
    return max(1, int(b_blk))


def make_axon(delay, is_excitatory, batch, dt=1.0, out_dtype=jnp.float32):
    """Construct an Axon step function (mirrors Axon.__construct__).

    delay          : (N, T) time lag in milliseconds per (axon, terminal)
    is_excitatory  : scalar bool or (N,) bool
    batch          : batch size
    Returns (init_history, step) where
        history = init_history()                      # padded carried state
        new_history, released = step(ap, history)     # forward() + release()
    and neurotransmitter == released * (2*is_excitatory - 1).
    """
    delay = jnp.asarray(delay, jnp.float32)
    assert delay.ndim == 2, "pass delay as (N_axons, N_terminals)"
    N, T = delay.shape
    delay_steps = (delay // jnp.float32(dt)).astype(jnp.int32)
    H = int(delay_steps.max()) + 1                    # history_length = delay.max() + 1
    assert int(delay_steps.max()) < H, "delay must be < history_length"

    is_excitatory = jnp.asarray(is_excitatory)
    if is_excitatory.ndim == 0:
        is_excitatory = jnp.broadcast_to(is_excitatory, (N,))
    # TODO(synk): per-terminal (N, T) is_excitatory would need an (Np, Tp) sign block.
    assert is_excitatory.shape == (N,), "is_excitatory must be scalar or per-axon"
    sign = 2.0 * is_excitatory.astype(jnp.float32) - 1.0

    Np = _round_up(N, _SUBLANE)
    Tp = _round_up(T, _LANE)
    vmem_limit, block_target, two_cores = _tuning()
    b_blk = _choose_batch_block(batch, Np, Tp, H, vmem_limit, block_target, two_cores)
    Bp = _round_up(batch, b_blk)                      # padded tail instead of divisor search
    grid = (Bp // b_blk,)

    dly_p = jnp.pad(delay_steps, ((0, Np - N), (0, Tp - T)))          # (Np, Tp)
    sgn_p = jnp.pad(sign, ((0, Np - N),))[:, None]                    # (Np, 1)

    cost = pl.CostEstimate(
        flops=Bp * Np * Tp * (H + 1),
        transcendentals=0,
        bytes_accessed=4 * (Bp * Np * (1 + 2 * H + Tp) + Np * Tp + Np),
    )

    call = pl.pallas_call(
        axon_kernel,
        out_shape=(
            jax.ShapeDtypeStruct((Bp, Np, H), jnp.float32),
            jax.ShapeDtypeStruct((Bp, Np, Tp), out_dtype),
        ),
        grid_spec=pltpu.PrefetchScalarGridSpec(
            num_scalar_prefetch=0,
            grid=grid,
            in_specs=[
                pl.BlockSpec((b_blk, Np, 1), lambda b: (b, 0, 0)),
                pl.BlockSpec((b_blk, Np, H), lambda b: (b, 0, 0)),
                # constant index maps -> delay/sign DMA'd once, not per grid step
                # TODO(synk): pipeline_mode=pl.Buffered(1) would drop their 2nd VMEM buffer.
                pl.BlockSpec((Np, Tp), lambda b: (0, 0)),
                pl.BlockSpec((Np, 1), lambda b: (0, 0)),
            ],
            out_specs=[
                pl.BlockSpec((b_blk, Np, H), lambda b: (b, 0, 0)),
                pl.BlockSpec((b_blk, Np, Tp), lambda b: (b, 0, 0)),
            ],
        ),
        compiler_params=pltpu.CompilerParams(
            dimension_semantics=("parallel",),
            vmem_limit_bytes=vmem_limit,
        ),
        # history input reuses the same HBM buffer as the new_history output
        input_output_aliases={1: 0},
        cost_estimate=cost,
    )

    def init_history():
        # Padded history is the carried state (Axon.__construct__ zero-inits it).
        # It stays padded across steps so aliasing + donation is a true in-place
        # HBM update with no per-step pad/slice round trip.
        return jnp.zeros((Bp, Np, H), jnp.float32)

    @functools.partial(jax.jit, donate_argnums=(1,))
    def step(action_potential, history):
        """Axon.forward(action_potential) followed by Axon.release()."""
        assert action_potential.shape == (batch, N)
        ap = action_potential.astype(jnp.float32)
        ap = jnp.pad(ap, ((0, Bp - batch), (0, Np - N)))[..., None]   # (Bp, Np, 1)
        new_hist, rel = call(ap, history, dly_p, sgn_p)
        if (Bp, Np, Tp) != (batch, N, T):
            rel = rel[:batch, :N, :T]
        return new_hist, rel

    return init_history, step


def ref_forward_release(action_potential, history, delay_steps, sign_axon):
    """Pure-JAX reference matching the PyTorch semantics."""
    new_history = jnp.concatenate(
        [action_potential[..., None], history[..., :-1]], axis=-1)
    N = delay_steps.shape[0]
    n_idx = jnp.arange(N)[:, None]
    delayed = new_history[:, n_idx, delay_steps]      # (B, N, T) gather over time
    nt = delayed                                      # identity ResponseFunction
    rel = nt * sign_axon[None, :, None]
    return new_history, nt, rel


if __name__ == "__main__":
    key = jax.random.PRNGKey(0)
    B, N, T = 8, 8, 128              # batch, shape=(8,), terminal=(128,)
    dt = 1.0
    k1, k2, k3 = jax.random.split(key, 3)

    # delay in ms per (axon, terminal); __construct__ does delay = (delay // dt).long()
    delay_ms = jax.random.randint(k1, (N, T), 0, 4).astype(jnp.float32)
    delay_steps = (delay_ms // dt).astype(jnp.int32)
    H = int(delay_steps.max()) + 1                    # history_length

    # is_excitatory per axon; release() uses 2*e - 1
    is_excitatory = jax.random.bernoulli(k2, 0.7, (N,))
    sign_axon = 2.0 * is_excitatory.astype(jnp.float32) - 1.0

    init_history, axon_step = make_axon(delay_ms, is_excitatory, batch=B, dt=dt)
    history = init_history()                          # padded carried state
    ref_history = jnp.zeros((B, N, H), jnp.float32)

    # run several forward steps so the delayed gather is fully exercised
    aps = jax.random.normal(k3, (H + 2, B, N), jnp.float32)
    rel = None
    for s in range(H + 2):
        history, rel = axon_step(aps[s], history)
        ref_history, ref_nt, ref_rel = ref_forward_release(
            aps[s], ref_history, delay_steps, sign_axon)

    nt = rel * sign_axon[None, :, None]               # Axon.neurotransmitter (sign^2 == 1)
    jax.block_until_ready((history, rel, nt))

    assert jnp.allclose(history[:B, :N, :], ref_history, atol=1e-6), "history mismatch"
    assert jnp.allclose(rel, ref_rel, atol=1e-6), "release mismatch"
    assert jnp.allclose(nt, ref_nt, atol=1e-6), "neurotransmitter mismatch"
    print("KERNEL_OK")
</pallas_src>

<mosaic_0001>
module attributes {stable_mosaic.version = 11 : i64} {
  func.func @axon_kernel(%arg0: i32, %arg1: memref<8x8x1xf32, #tpu.memory_space<vmem>>, %arg2: memref<8x8x4xf32, #tpu.memory_space<vmem>>, %arg3: memref<8x128xi32, #tpu.memory_space<vmem>>, %arg4: memref<8x1xf32, #tpu.memory_space<vmem>>, %arg5: memref<8x8x4xf32, #tpu.memory_space<vmem>>, %arg6: memref<8x8x128xf32, #tpu.memory_space<vmem>>) attributes {dimension_semantics = [#tpu.dimension_semantics<parallel>], iteration_bounds = array<i64: 1>, scalar_prefetch = 0 : i64, scratch_operands = 0 : i64, tpu.core_type = #tpu.core_type<tc>, window_params = [{transform_indices = @transform_0, window_bounds = array<i64: 8, 8, 1>}, {transform_indices = @transform_1, window_bounds = array<i64: 8, 8, 4>}, {pipeline_mode = #tpu.pipeline_mode<synchronous>, transform_indices = @transform_2, window_bounds = array<i64: 8, 128>}, {pipeline_mode = #tpu.pipeline_mode<synchronous>, transform_indices = @transform_3, window_bounds = array<i64: 8, 1>}, {transform_indices = @transform_4, window_bounds = array<i64: 8, 8, 4>}, {transform_indices = @transform_5, window_bounds = array<i64: 8, 8, 128>}]} {
    %c0 = arith.constant 0 : index
    %c0_0 = arith.constant 0 : index
    %c0_1 = arith.constant 0 : index
    %0 = vector.load %arg1[%c0, %c0_0, %c0_1] : memref<8x8x1xf32, #tpu.memory_space<vmem>>, vector<8x8x1xf32>
    %c0_2 = arith.constant 0 : index
    %c0_3 = arith.constant 0 : index
    %1 = vector.load %arg3[%c0_2, %c0_3] : memref<8x128xi32, #tpu.memory_space<vmem>>, vector<8x128xi32>
    %2 = vector.shape_cast %1 : vector<8x128xi32> to vector<1x8x128xi32>
    %c0_i32 = arith.constant 0 : i32
    %3 = vector.broadcast %c0_i32 : i32 to vector<1x8x128xi32>
    %4 = arith.cmpi eq, %2, %3 : vector<1x8x128xi32>
    %cst = arith.constant 0.000000e+00 : f32
    %5 = vector.shape_cast %4 : vector<1x8x128xi1> to vector<1x8x128xi1>
    %6 = vector.broadcast %5 : vector<1x8x128xi1> to vector<8x8x128xi1>
    %7 = vector.shape_cast %0 : vector<8x8x1xf32> to vector<8x8x1xf32>
    %8 = vector.broadcast %7 : vector<8x8x1xf32> to vector<8x8x128xf32>
    %9 = vector.broadcast %cst : f32 to vector<8x8x128xf32>
    %10 = arith.select %6, %8, %9 : vector<8x8x128xi1>, vector<8x8x128xf32>
    %c0_4 = arith.constant 0 : index
    %c0_5 = arith.constant 0 : index
    %c0_6 = arith.constant 0 : index
    %11 = vector.load %arg2[%c0_4, %c0_5, %c0_6] : memref<8x8x4xf32, #tpu.memory_space<vmem>>, vector<8x8x4xf32>
    %c1_i32 = arith.constant 1 : i32
    %12 = vector.broadcast %c1_i32 : i32 to vector<1x8x128xi32>
    %13 = arith.cmpi eq, %2, %12 : vector<1x8x128xi32>
    %14 = vector.extract_strided_slice %11 {offsets = [0, 0, 0], sizes = [8, 8, 1], strides = [1, 1, 1]} : vector<8x8x4xf32> to vector<8x8x1xf32>
    %15 = vector.shape_cast %13 : vector<1x8x128xi1> to vector<1x8x128xi1>
    %16 = vector.broadcast %15 : vector<1x8x128xi1> to vector<8x8x128xi1>
    %17 = vector.shape_cast %14 : vector<8x8x1xf32> to vector<8x8x1xf32>
    %18 = vector.broadcast %17 : vector<8x8x1xf32> to vector<8x8x128xf32>
    %19 = arith.select %16, %18, %10 : vector<8x8x128xi1>, vector<8x8x128xf32>
    %c2_i32 = arith.constant 2 : i32
    %20 = vector.broadcast %c2_i32 : i32 to vector<1x8x128xi32>
    %21 = arith.cmpi eq, %2, %20 : vector<1x8x128xi32>
    %22 = vector.extract_strided_slice %11 {offsets = [0, 0, 1], sizes = [8, 8, 1], strides = [1, 1, 1]} : vector<8x8x4xf32> to vector<8x8x1xf32>
    %23 = vector.shape_cast %21 : vector<1x8x128xi1> to vector<1x8x128xi1>
    %24 = vector.broadcast %23 : vector<1x8x128xi1> to vector<8x8x128xi1>
    %25 = vector.shape_cast %22 : vector<8x8x1xf32> to vector<8x8x1xf32>
    %26 = vector.broadcast %25 : vector<8x8x1xf32> to vector<8x8x128xf32>
    %27 = arith.select %24, %26, %19 : vector<8x8x128xi1>, vector<8x8x128xf32>
    %c3_i32 = arith.constant 3 : i32
    %28 = vector.broadcast %c3_i32 : i32 to vector<1x8x128xi32>
    %29 = arith.cmpi eq, %2, %28 : vector<1x8x128xi32>
    %30 = vector.extract_strided_slice %11 {offsets = [0, 0, 2], sizes = [8, 8, 1], strides = [1, 1, 1]} : vector<8x8x4xf32> to vector<8x8x1xf32>
    %31 = vector.shape_cast %29 : vector<1x8x128xi1> to vector<1x8x128xi1>
    %32 = vector.broadcast %31 : vector<1x8x128xi1> to vector<8x8x128xi1>
    %33 = vector.shape_cast %30 : vector<8x8x1xf32> to vector<8x8x1xf32>
    %34 = vector.broadcast %33 : vector<8x8x1xf32> to vector<8x8x128xf32>
    %35 = arith.select %32, %34, %27 : vector<8x8x128xi1>, vector<8x8x128xf32>
    %c0_7 = arith.constant 0 : index
    %c0_8 = arith.constant 0 : index
    %36 = vector.load %arg4[%c0_7, %c0_8] : memref<8x1xf32, #tpu.memory_space<vmem>>, vector<8x1xf32>
    %37 = vector.shape_cast %36 : vector<8x1xf32> to vector<1x8x1xf32>
    %38 = vector.broadcast %37 : vector<1x8x1xf32> to vector<8x8x128xf32>
    %39 = arith.mulf %35, %38 : vector<8x8x128xf32>
    %c0_9 = arith.constant 0 : index
    %c0_10 = arith.constant 0 : index
    %c0_11 = arith.constant 0 : index
    %40 = vector.load %arg6[%c0_9, %c0_10, %c0_11] : memref<8x8x128xf32, #tpu.memory_space<vmem>>, vector<8x8x128xf32>
    tpu.vector_store %arg6[%c0_9, %c0_10, %c0_11], %39 {strides = array<i32>} : memref<8x8x128xf32, #tpu.memory_space<vmem>>, vector<8x8x128xf32>,
    %c0_12 = arith.constant 0 : index
    %c0_13 = arith.constant 0 : index
    %c0_14 = arith.constant 0 : index
    %41 = vector.load %arg5[%c0_12, %c0_13, %c0_14] : memref<8x8x4xf32, #tpu.memory_space<vmem>>, vector<8x8x1xf32>
    tpu.vector_store %arg5[%c0_12, %c0_13, %c0_14], %0 {strides = array<i32>} : memref<8x8x4xf32, #tpu.memory_space<vmem>>, vector<8x8x1xf32>,
    %c0_15 = arith.constant 0 : index
    %c0_16 = arith.constant 0 : index
    %c0_17 = arith.constant 0 : index
    %42 = vector.load %arg2[%c0_15, %c0_16, %c0_17] : memref<8x8x4xf32, #tpu.memory_space<vmem>>, vector<8x8x3xf32>
    %c0_18 = arith.constant 0 : index
    %c0_19 = arith.constant 0 : index
    %c1 = arith.constant 1 : index
    %43 = vector.load %arg5[%c0_18, %c0_19, %c1] : memref<8x8x4xf32, #tpu.memory_space<vmem>>, vector<8x8x3xf32>
    tpu.vector_store %arg5[%c0_18, %c0_19, %c1], %42 {strides = array<i32>} : memref<8x8x4xf32, #tpu.memory_space<vmem>>, vector<8x8x3xf32>,
    return
  }
  func.func @transform_0(%arg0: i32) -> (i32, i32, i32) {
    %c0_i32 = arith.constant 0 : i32
    %c0_i32_0 = arith.constant 0 : i32
    %c0_i32_1 = arith.constant 0 : i32
    return %arg0, %c0_i32, %c0_i32_0 : i32, i32, i32
  }
  func.func @transform_1(%arg0: i32) -> (i32, i32, i32) {
    %c0_i32 = arith.constant 0 : i32
    %c0_i32_0 = arith.constant 0 : i32
    %c0_i32_1 = arith.constant 0 : i32
    return %arg0, %c0_i32, %c0_i32_0 : i32, i32, i32
  }
  func.func @transform_2(%arg0: i32) -> (i32, i32) {
    %c0_i32 = arith.constant 0 : i32
    %c0_i32_0 = arith.constant 0 : i32
    %c0_i32_1 = arith.constant 0 : i32
    return %c0_i32, %c0_i32_0 : i32, i32
  }
  func.func @transform_3(%arg0: i32) -> (i32, i32) {
    %c0_i32 = arith.constant 0 : i32
    %c0_i32_0 = arith.constant 0 : i32
    %c0_i32_1 = arith.constant 0 : i32
    return %c0_i32, %c0_i32_0 : i32, i32
  }
  func.func @transform_4(%arg0: i32) -> (i32, i32, i32) {
    %c0_i32 = arith.constant 0 : i32
    %c0_i32_0 = arith.constant 0 : i32
    %c0_i32_1 = arith.constant 0 : i32
    return %arg0, %c0_i32, %c0_i32_0 : i32, i32, i32
  }
  func.func @transform_5(%arg0: i32) -> (i32, i32, i32) {
    %c0_i32 = arith.constant 0 : i32
    %c0_i32_0 = arith.constant 0 : i32
    %c0_i32_1 = arith.constant 0 : i32
    return %arg0, %c0_i32, %c0_i32_0 : i32, i32, i32
  }
}

</mosaic_0001>

<llo_original>
// kernel: step.1
$region0: #{step.1}
  #allocation0 [shape = 'u32[]', space=smem, size = 0x4, offset = 0x4, fixed_abs, tag = 'smem constant byte address 0x4 - core index']
  #allocation1 [shape = 'u32[144,128]{1,0:T(1,128)}', space=vmem, size = 0x12000, scoped, tag = 'internal scratch']
  %s0 = inlined_call_operand.vmem [shape: f32[8,8,1], index: 0, kind: input, shape index: {}]
  %s1 = inlined_call_operand.vmem [shape: f32[8,8,4], index: 1, kind: input, shape index: {}, may-alias: {1,4}]
  %s2 = inlined_call_operand.vmem [shape: s32[8,128], index: 2, kind: input, shape index: {}]
  %s3 = inlined_call_operand.vmem [shape: f32[8,1], index: 3, kind: input, shape index: {}]
  %s4 = inlined_call_operand.vmem [shape: f32[8,8,4], index: 4, kind: output, shape index: {0}, may-alias: {1,4}]
  %s5 = inlined_call_operand.hbm [shape: f32[8,8,128], index: 5, kind: output, shape index: {1}]
  %6 = xla_tuple %s4, %s5
  %s7 = sld [smem:[#allocation0]]
  $region34: #{step.1} parent=0
    _
  %s9 = ssub.s32 1, %s7
  %s10 = scalar_select 0, %s9, %s7
  $region1: #{step.1} parent=0
    #allocation2 [shape = 'u8[32768]{0}', space=vmem, size = 0x8000, scoped, tag = 'output window, operand 1, single buffered']
    #allocation3 [shape = 's32[1]{0}', space=sflag, size = 0x4, scoped, tag = 'scoped memory for step.1']
    %11 = vsyncpa [#allocation3], 0
    // Predicated region
    $region2: #{step.1} parent=1 // pred_check
      _
    $region3: #{step.1} parent=1 // pred_check_branch
      %13 = sbr.rel (0) target = $region5
    $region4: #{step.1} parent=1 // pred_region
      _
    $region5: #{step.1} parent=1 // pred_fallthru
      _
    // Predicated region
    $region6: #{step.1} parent=1 // pred_check
      _
    $region7: #{step.1} parent=1 // pred_check_branch
      %15 = sbr.rel (0) target = $region9
    $region8: #{step.1} parent=1 // pred_region
      _
    $region9: #{step.1} parent=1 // pred_fallthru
      _
    // Predicated region
    $region10: #{step.1} parent=1 // pred_check
      _
    $region11: #{step.1} parent=1 // pred_check_branch
      %17 = sbr.rel (0) target = $region13
    $region12: #{step.1} parent=1 // pred_region
      _
    $region13: #{step.1} parent=1 // pred_fallthru
      _
    // Predicated region
    $region14: #{step.1} parent=1 // pred_check
      _
    $region15: #{step.1} parent=1 // pred_check_branch
      %19 = sbr.rel (0) target = $region17
    $region16: #{step.1} parent=1 // pred_region
      _
    $region17: #{step.1} parent=1 // pred_fallthru
      _
    %v20 = vld [vmem:[%s0] sm:$0xff]
    %v21 = vld [vmem:[%s0 + $0x8] sm:$0xff]
    %v22 = vld [vmem:[%s0 + $0x10] sm:$0xff]
    %v23 = vld [vmem:[%s0 + $0x18] sm:$0xff]
    %v24 = vld [vmem:[%s0 + $0x20] sm:$0xff]
    %v25 = vld [vmem:[%s0 + $0x28] sm:$0xff]
    %v26 = vld [vmem:[%s0 + $0x30] sm:$0xff]
    %v27 = vld [vmem:[%s0 + $0x38] sm:$0xff]
    %v28 = vld [vmem:[%s2] sm:$0xff]
    %vm29 = vcmp.eq.s32.totalorder %v28, 0
    %v30 = vsel %vm29, 1, 0
    %vm31 = vcmp.eq.s32.totalorder %v30, 1
    %33 = vset.pattern.permute.xlu0 0
    %34 = vperm.xlu0 %33, %v20
    %v35 = vpop.permute.xlu0 %34
    %38 = vset.pattern.permute.xlu0 0
    %39 = vperm.xlu0 %38, %v21
    %v40 = vpop.permute.xlu0 %39
    %43 = vset.pattern.permute.xlu0 0
    %44 = vperm.xlu0 %43, %v22
    %v45 = vpop.permute.xlu0 %44
    %48 = vset.pattern.permute.xlu0 0
    %49 = vperm.xlu0 %48, %v23
    %v50 = vpop.permute.xlu0 %49
    %53 = vset.pattern.permute.xlu0 0
    %54 = vperm.xlu0 %53, %v24
    %v55 = vpop.permute.xlu0 %54
    %58 = vset.pattern.permute.xlu0 0
    %59 = vperm.xlu0 %58, %v25
    %v60 = vpop.permute.xlu0 %59
    %63 = vset.pattern.permute.xlu0 0
    %64 = vperm.xlu0 %63, %v26
    %v65 = vpop.permute.xlu0 %64
    %68 = vset.pattern.permute.xlu0 0
    %69 = vperm.xlu0 %68, %v27
    %v70 = vpop.permute.xlu0 %69
    %v72 = vsel %vm31, %v35, 0.0
    %v73 = vsel %vm31, %v40, 0.0
    %v74 = vsel %vm31, %v45, 0.0
    %v75 = vsel %vm31, %v50, 0.0
    %v76 = vsel %vm31, %v55, 0.0
    %v77 = vsel %vm31, %v60, 0.0
    %v78 = vsel %vm31, %v65, 0.0
    %v79 = vsel %vm31, %v70, 0.0
    %v80 = vld [vmem:[%s1] sm:$0xff]
    %v81 = vld [vmem:[%s1 + $0x8] sm:$0xff]
    %v82 = vld [vmem:[%s1 + $0x10] sm:$0xff]
    %v83 = vld [vmem:[%s1 + $0x18] sm:$0xff]
    %v84 = vld [vmem:[%s1 + $0x20] sm:$0xff]
    %v85 = vld [vmem:[%s1 + $0x28] sm:$0xff]
    %v86 = vld [vmem:[%s1 + $0x30] sm:$0xff]
    %v87 = vld [vmem:[%s1 + $0x38] sm:$0xff]
    %vm88 = vcmp.eq.s32.totalorder %v28, 1
    %v89 = vsel %vm88, 1, 0
    %vm90 = vcmp.eq.s32.totalorder %v89, 1
    %92 = vset.pattern.permute.xlu0 0
    %93 = vperm.xlu0 %92, %v80
    %v94 = vpop.permute.xlu0 %93
    %97 = vset.pattern.permute.xlu0 0
    %98 = vperm.xlu0 %97, %v81
    %v99 = vpop.permute.xlu0 %98
    %102 = vset.pattern.permute.xlu0 0
    %103 = vperm.xlu0 %102, %v82
    %v104 = vpop.permute.xlu0 %103
    %107 = vset.pattern.permute.xlu0 0
    %108 = vperm.xlu0 %107, %v83
    %v109 = vpop.permute.xlu0 %108
    %112 = vset.pattern.permute.xlu0 0
    %113 = vperm.xlu0 %112, %v84
    %v114 = vpop.permute.xlu0 %113
    %117 = vset.pattern.permute.xlu0 0
    %118 = vperm.xlu0 %117, %v85
    %v119 = vpop.permute.xlu0 %118
    %122 = vset.pattern.permute.xlu0 0
    %123 = vperm.xlu0 %122, %v86
    %v124 = vpop.permute.xlu0 %123
    %127 = vset.pattern.permute.xlu0 0
    %128 = vperm.xlu0 %127, %v87
    %v129 = vpop.permute.xlu0 %128
    %v131 = vsel %vm90, %v94, %v72
    %v132 = vsel %vm90, %v99, %v73
    %v133 = vsel %vm90, %v104, %v74
    %v134 = vsel %vm90, %v109, %v75
    %v135 = vsel %vm90, %v114, %v76
    %v136 = vsel %vm90, %v119, %v77
    %v137 = vsel %vm90, %v124, %v78
    %v138 = vsel %vm90, %v129, %v79
    %vm139 = vcmp.eq.s32.totalorder %v28, 2
    %v140 = vsel %vm139, 1, 0
    %vm141 = vcmp.eq.s32.totalorder %v140, 1
    %142 = vset.pattern.permute.xlu0 1
    %143 = vperm.xlu0 %142, %v80
    %v144 = vpop.permute.xlu0 %143
    %146 = vset.pattern.permute.xlu0 1
    %147 = vperm.xlu0 %146, %v81
    %v148 = vpop.permute.xlu0 %147
    %150 = vset.pattern.permute.xlu0 1
    %151 = vperm.xlu0 %150, %v82
    %v152 = vpop.permute.xlu0 %151
    %154 = vset.pattern.permute.xlu0 1
    %155 = vperm.xlu0 %154, %v83
    %v156 = vpop.permute.xlu0 %155
    %158 = vset.pattern.permute.xlu0 1
    %159 = vperm.xlu0 %158, %v84
    %v160 = vpop.permute.xlu0 %159
    %162 = vset.pattern.permute.xlu0 1
    %163 = vperm.xlu0 %162, %v85
    %v164 = vpop.permute.xlu0 %163
    %166 = vset.pattern.permute.xlu0 1
    %167 = vperm.xlu0 %166, %v86
    %v168 = vpop.permute.xlu0 %167
    %170 = vset.pattern.permute.xlu0 1
    %171 = vperm.xlu0 %170, %v87
    %v172 = vpop.permute.xlu0 %171
    %v174 = vsel %vm141, %v144, %v131
    %v175 = vsel %vm141, %v148, %v132
    %v176 = vsel %vm141, %v152, %v133
    %v177 = vsel %vm141, %v156, %v134
    %v178 = vsel %vm141, %v160, %v135
    %v179 = vsel %vm141, %v164, %v136
    %v180 = vsel %vm141, %v168, %v137
    %v181 = vsel %vm141, %v172, %v138
    %vm182 = vcmp.eq.s32.totalorder %v28, 3
    %v183 = vsel %vm182, 1, 0
    %vm184 = vcmp.eq.s32.totalorder %v183, 1
    %185 = vset.pattern.permute.xlu0 2
    %186 = vperm.xlu0 %185, %v80
    %v187 = vpop.permute.xlu0 %186
    %189 = vset.pattern.permute.xlu0 2
    %190 = vperm.xlu0 %189, %v81
    %v191 = vpop.permute.xlu0 %190
    %193 = vset.pattern.permute.xlu0 2
    %194 = vperm.xlu0 %193, %v82
    %v195 = vpop.permute.xlu0 %194
    %197 = vset.pattern.permute.xlu0 2
    %198 = vperm.xlu0 %197, %v83
    %v199 = vpop.permute.xlu0 %198
    %201 = vset.pattern.permute.xlu0 2
    %202 = vperm.xlu0 %201, %v84
    %v203 = vpop.permute.xlu0 %202
    %205 = vset.pattern.permute.xlu0 2
    %206 = vperm.xlu0 %205, %v85
    %v207 = vpop.permute.xlu0 %206
    %209 = vset.pattern.permute.xlu0 2
    %210 = vperm.xlu0 %209, %v86
    %v211 = vpop.permute.xlu0 %210
    %213 = vset.pattern.permute.xlu0 2
    %214 = vperm.xlu0 %213, %v87
    %v215 = vpop.permute.xlu0 %214
    %v217 = vsel %vm184, %v187, %v174
    %v218 = vsel %vm184, %v191, %v175
    %v219 = vsel %vm184, %v195, %v176
    %v220 = vsel %vm184, %v199, %v177
    %v221 = vsel %vm184, %v203, %v178
    %v222 = vsel %vm184, %v207, %v179
    %v223 = vsel %vm184, %v211, %v180
    %v224 = vsel %vm184, %v215, %v181
    %v225 = vld [vmem:[%s3] sm:$0xff]
    %227 = vset.pattern.permute.xlu0 0
    %228 = vperm.xlu0 %227, %v225
    %v229 = vpop.permute.xlu0 %228
    %v231 = vmul.f32 %v217, %v229
    %v232 = vmul.f32 %v218, %v229
    %v233 = vmul.f32 %v219, %v229
    %v234 = vmul.f32 %v220, %v229
    %v235 = vmul.f32 %v221, %v229
    %v236 = vmul.f32 %v222, %v229
    %v237 = vmul.f32 %v223, %v229
    %v238 = vmul.f32 %v224, %v229
    %239 = vst [vmem:[#allocation2] sm:$0xff] %v231
    %240 = vst [vmem:[#allocation2 + $0x8] sm:$0xff] %v232
    %241 = vst [vmem:[#allocation2 + $0x10] sm:$0xff] %v233
    %242 = vst [vmem:[#allocation2 + $0x18] sm:$0xff] %v234
    %243 = vst [vmem:[#allocation2 + $0x20] sm:$0xff] %v235
    %244 = vst [vmem:[#allocation2 + $0x28] sm:$0xff] %v236
    %245 = vst [vmem:[#allocation2 + $0x30] sm:$0xff] %v237
    %246 = vst [vmem:[#allocation2 + $0x38] sm:$0xff] %v238
    %vm247 = vcmask 7168
    %248 = vst.msk [vmem:[%s4] sm:$0xff] %vm247, %v20
    %249 = vst.msk [vmem:[%s4 + $0x8] sm:$0xff] %vm247, %v21
    %250 = vst.msk [vmem:[%s4 + $0x10] sm:$0xff] %vm247, %v22
    %251 = vst.msk [vmem:[%s4 + $0x18] sm:$0xff] %vm247, %v23
    %252 = vst.msk [vmem:[%s4 + $0x20] sm:$0xff] %vm247, %v24
    %253 = vst.msk [vmem:[%s4 + $0x28] sm:$0xff] %vm247, %v25
    %254 = vst.msk [vmem:[%s4 + $0x30] sm:$0xff] %vm247, %v26
    %255 = vst.msk [vmem:[%s4 + $0x38] sm:$0xff] %vm247, %v27
    %v256 = vld [vmem:[%s1] sm:$0xff]
    %v257 = vld [vmem:[%s1 + $0x8] sm:$0xff]
    %v258 = vld [vmem:[%s1 + $0x10] sm:$0xff]
    %v259 = vld [vmem:[%s1 + $0x18] sm:$0xff]
    %v260 = vld [vmem:[%s1 + $0x20] sm:$0xff]
    %v261 = vld [vmem:[%s1 + $0x28] sm:$0xff]
    %v262 = vld [vmem:[%s1 + $0x30] sm:$0xff]
    %v263 = vld [vmem:[%s1 + $0x38] sm:$0xff]
    %272 = vrot.lane.b32.xlu0 %v256, 1
    %v273 = vpop.permute.xlu0 %272
    %274 = vrot.lane.b32.xlu0 %v257, 1
    %v275 = vpop.permute.xlu0 %274
    %276 = vrot.lane.b32.xlu0 %v258, 1
    %v277 = vpop.permute.xlu0 %276
    %278 = vrot.lane.b32.xlu0 %v259, 1
    %v279 = vpop.permute.xlu0 %278
    %280 = vrot.lane.b32.xlu0 %v260, 1
    %v281 = vpop.permute.xlu0 %280
    %282 = vrot.lane.b32.xlu0 %v261, 1
    %v283 = vpop.permute.xlu0 %282
    %284 = vrot.lane.b32.xlu0 %v262, 1
    %v285 = vpop.permute.xlu0 %284
    %286 = vrot.lane.b32.xlu0 %v263, 1
    %v287 = vpop.permute.xlu0 %286
    %vm296 = vcmask 31752
    %297 = vst.msk [vmem:[%s4] sm:$0xff] %vm296, %v273
    %298 = vst.msk [vmem:[%s4 + $0x8] sm:$0xff] %vm296, %v275
    %299 = vst.msk [vmem:[%s4 + $0x10] sm:$0xff] %vm296, %v277
    %300 = vst.msk [vmem:[%s4 + $0x18] sm:$0xff] %vm296, %v279
    %301 = vst.msk [vmem:[%s4 + $0x20] sm:$0xff] %vm296, %v281
    %302 = vst.msk [vmem:[%s4 + $0x28] sm:$0xff] %vm296, %v283
    %303 = vst.msk [vmem:[%s4 + $0x30] sm:$0xff] %vm296, %v285
    %304 = vst.msk [vmem:[%s4 + $0x38] sm:$0xff] %vm296, %v287
    // Predicated region
    $region18: #{step.1} parent=1 // pred_check
      _
    $region19: #{step.1} parent=1 // pred_check_branch
      %306 = sbr.rel (0) target = $region21
    $region20: #{step.1} parent=1 // pred_region
      _
    $region21: #{step.1} parent=1 // pred_fallthru
      _
    // Predicated region
    $region22: #{step.1} parent=1 // pred_check
      _
    $region23: #{step.1} parent=1 // pred_check_branch
      %308 = sbr.rel (0) target = $region25
    $region24: #{step.1} parent=1 // pred_region
      %s310 = ssub.s32 1024, 1024
      %311 = vsyncadd [#allocation3], %s310
      %s312 = sshll.u32 [#allocation2], 4
      %s313 = int_to_ptr.vmem [resolvable:$true] %s312
      %318 = dma.vmem_to_hbm [thread:$0]  %s313, 1024, %s5, [#allocation3], 128, 128, 8
    $region25: #{step.1} parent=1 // pred_fallthru
      _
    // Predicated region
    $region26: #{step.1} parent=1 // pred_check
      _
    $region27: #{step.1} parent=1 // pred_check_branch
      %320 = sbr.rel (0) target = $region29
    $region28: #{step.1} parent=1 // pred_region
      _
    $region29: #{step.1} parent=1 // pred_fallthru
      _
    // Predicated region
    $region30: #{step.1} parent=1 // pred_check
      _
    $region31: #{step.1} parent=1 // pred_check_branch
      %322 = sbr.rel (0) target = $region33
    $region32: #{step.1} parent=1 // pred_region
      %323 = dma.done [#allocation3], 1024
    $region33: #{step.1} parent=1 // pred_fallthru
      _
    %324 = vsyncpa [#allocation3], 1

</llo_original>
